<compile_context>
chip_gen: v7x
topology: tpu7x:2x2x1
jax: 0.10.0
libtpu: 0.0.40
codegen_flags: <defaults>
</compile_context>

<pallas_src>
import functools

import jax
import jax.numpy as jnp
from jax import lax
from jax.experimental import pallas as pl
from jax.experimental.pallas import tpu as pltpu

_LANES = 128
_NUM_CORES = 2  # leading "parallel" axis: v7x megacore split; serial (correct) on 1-TC chips


def _round_up(x, mult):
    return ((x + mult - 1) // mult) * mult


def _ratio_loss_kernel(ratio_ref, *refs, num_clips, steps_per_core, tile_m,
                       n_elems, needs_mask):
    # refs layout: clip tiles[0..num_clips-1], width tile, out block.
    clip_refs = refs[:num_clips]
    width_ref = refs[num_clips]
    out_ref = refs[num_clips + 1]        # (8, 128) resident per-core partial sum

    c = pl.program_id(0)                 # core slice ("parallel")
    i = pl.program_id(1)                 # row-block step ("arbitrary" reduction)

    @pl.when(i == 0)
    def _():
        out_ref[...] = jnp.zeros_like(out_ref)

    ratio = ratio_ref[0]                 # SMEM scalar read

    # loss_clip = (sum over clip losses) * target_ratio   (pure VPU; bf16 upcast here)
    loss_clip = clip_refs[0][...].astype(jnp.float32)
    for r in clip_refs[1:]:
        loss_clip = loss_clip + r[...].astype(jnp.float32)

    diff = width_ref[...].astype(jnp.float32) - loss_clip * ratio
    sq = diff * diff

    if needs_mask:
        # Zero any element whose LOGICAL flat index is >= n_elems before the
        # accumulate (ragged last block / clamped phantom blocks read garbage).
        blk = c * steps_per_core + i
        base = blk * (tile_m * _LANES)
        rows = lax.broadcasted_iota(jnp.int32, (tile_m, _LANES), 0)
        lanes = lax.broadcasted_iota(jnp.int32, (tile_m, _LANES), 1)
        elem = base + rows * _LANES + lanes
        sq = jnp.where(elem < n_elems, sq, 0.0)

    # Fold (tile_m,128) -> (8,128): keeps f32 (8,128) vreg tiling; axis-0 sum is
    # tile_m/8 - 1 VPU adds. No cross-lane (XLU) reduce on the hot path.
    partial = jnp.sum(sq.reshape(tile_m // 8, 8, _LANES), axis=0)
    out_ref[...] += partial


def ratio_loss_pallas(clip_losses, width_loss, target_ratio, *, tile_m=2048):
    """clip_losses: list of arrays, each the same shape as width_loss.
    Returns scalar float32 MSE(width_loss, target_ratio * sum(clip_losses))."""
    clip_losses = list(clip_losses)
    k = len(clip_losses)
    assert k >= 1
    n_elems = int(width_loss.size)
    assert n_elems > 0

    m = pl.cdiv(n_elems, _LANES)                 # slab rows
    padded_elems = m * _LANES                    # pad only to a 128-lane boundary
    tile_m = max(16, min(_round_up(tile_m, 16), _round_up(m, 16)))
    num_row_blocks = pl.cdiv(m, tile_m)
    steps_per_core = pl.cdiv(num_row_blocks, _NUM_CORES)
    # Mask iff the (core, step) coverage overshoots the true element count.
    needs_mask = (_NUM_CORES * steps_per_core * tile_m * _LANES) != n_elems

    def to_slab(x):
        flat = x.reshape(-1)
        if padded_elems != n_elems:
            flat = jnp.pad(flat, (0, padded_elems - n_elems))
        return flat.reshape(m, _LANES)

    slabs = [to_slab(x) for x in clip_losses] + [to_slab(width_loss)]
    ratio_arr = jnp.full((1,), target_ratio, dtype=jnp.float32)

    def row_block_map(c, i):
        # Clamp phantom blocks (past the last row block) to a valid DMA target;
        # their contribution is zeroed by the in-kernel mask.
        return (jnp.minimum(c * steps_per_core + i, num_row_blocks - 1), 0)

    in_specs = [pl.BlockSpec(memory_space=pltpu.SMEM)]          # target_ratio
    in_specs += [pl.BlockSpec((tile_m, _LANES), row_block_map)
                 for _ in range(k + 1)]                          # clips + width

    kernel = functools.partial(
        _ratio_loss_kernel,
        num_clips=k,
        steps_per_core=steps_per_core,
        tile_m=tile_m,
        n_elems=n_elems,
        needs_mask=needs_mask,
    )

    # Double-buffered input residency, sized from each input's actual dtype
    # (bf16 inputs halve both the streamed HBM bytes and VMEM use).
    resid = sum(2 * tile_m * _LANES * jnp.dtype(x.dtype).itemsize
                for x in clip_losses + [width_loss])
    vmem_limit = int(min(96 * 1024 * 1024, max(32 * 1024 * 1024, resid * 2)))

    out_partials = pl.pallas_call(
        kernel,
        out_shape=jax.ShapeDtypeStruct((_NUM_CORES, 8, _LANES), jnp.float32),
        grid_spec=pltpu.PrefetchScalarGridSpec(
            num_scalar_prefetch=0,
            grid=(_NUM_CORES, steps_per_core),
            in_specs=in_specs,
            out_specs=pl.BlockSpec((None, 8, _LANES), lambda c, i: (c, 0, 0)),
        ),
        compiler_params=pltpu.CompilerParams(
            dimension_semantics=("parallel", "arbitrary"),
            vmem_limit_bytes=vmem_limit,
        ),
    )(ratio_arr, *slabs)

    # Two tiny per-core partials: reduce + mean in the wrapper.
    return jnp.sum(out_partials) / jnp.float32(n_elems)


def ratio_loss_ref(clip_losses, width_loss, target_ratio):
    loss_clip = jnp.zeros_like(width_loss, dtype=jnp.float32)
    for c in clip_losses:
        loss_clip = loss_clip + c.astype(jnp.float32)
    loss_clip = loss_clip * jnp.float32(target_ratio)
    return jnp.mean((width_loss.astype(jnp.float32) - loss_clip) ** 2)


if __name__ == "__main__":
    key = jax.random.PRNGKey(0)
    target_ratio = 0.5  # args.ratio_loss (deterministic hyperparameter)

    # Small NCHW-shaped per-element loss tensors: batch=2, channels=4, spatial=16
    shape = (2, 4, 16, 16)
    k_clip, k_w = jax.random.split(key)
    clip_keys = jax.random.split(k_clip, 3)
    clip_losses = [jax.random.normal(kk, shape, dtype=jnp.float32) for kk in clip_keys]
    width_loss = jax.random.normal(k_w, shape, dtype=jnp.float32)

    out = jax.block_until_ready(ratio_loss_pallas(clip_losses, width_loss, target_ratio))
    ref = jax.block_until_ready(ratio_loss_ref(clip_losses, width_loss, target_ratio))

    assert jnp.allclose(out, ref, rtol=1e-5, atol=1e-5), (out, ref)
    print("KERNEL_OK")
</pallas_src>

<mosaic_0001>
module attributes {stable_mosaic.version = 11 : i64} {
  func.func @_ratio_loss_kernel(%arg0: i32, %arg1: i32, %arg2: memref<1xf32, #tpu.memory_space<smem>>, %arg3: memref<16x128xf32, #tpu.memory_space<vmem>>, %arg4: memref<16x128xf32, #tpu.memory_space<vmem>>, %arg5: memref<16x128xf32, #tpu.memory_space<vmem>>, %arg6: memref<16x128xf32, #tpu.memory_space<vmem>>, %arg7: memref<1x8x128xf32, #tpu.memory_space<vmem>>) attributes {dimension_semantics = [#tpu.dimension_semantics<parallel>, #tpu.dimension_semantics<arbitrary>], iteration_bounds = array<i64: 2, 1>, scalar_prefetch = 0 : i64, scratch_operands = 0 : i64, tpu.core_type = #tpu.core_type<tc>, window_params = [{transform_indices = @transform_0, window_bounds = array<i64: 1>}, {transform_indices = @transform_1, window_bounds = array<i64: 16, 128>}, {transform_indices = @transform_2, window_bounds = array<i64: 16, 128>}, {transform_indices = @transform_3, window_bounds = array<i64: 16, 128>}, {transform_indices = @transform_4, window_bounds = array<i64: 16, 128>}, {transform_indices = @transform_5, window_bounds = array<i64: 1, 8, 128>}]} {
    %c0_i32 = arith.constant 0 : i32
    %0 = arith.cmpi eq, %arg1, %c0_i32 : i32
    %1 = arith.extui %0 : i1 to i32
    %c0_i32_0 = arith.constant 0 : i32
    %2 = arith.cmpi ne, %1, %c0_i32_0 : i32
    scf.if %2 {
      %cst_17 = arith.constant 0.000000e+00 : f32
      %36 = vector.broadcast %cst_17 : f32 to vector<8x128xf32>
      %c0_18 = arith.constant 0 : index
      %c0_19 = arith.constant 0 : index
      %c0_20 = arith.constant 0 : index
      %37 = vector.load %arg7[%c0_18, %c0_19, %c0_20] : memref<1x8x128xf32, #tpu.memory_space<vmem>>, vector<1x8x128xf32>
      %38 = vector.shape_cast %37 : vector<1x8x128xf32> to vector<8x128xf32>
      %39 = vector.shape_cast %36 : vector<8x128xf32> to vector<1x8x128xf32>
      tpu.vector_store %arg7[%c0_18, %c0_19, %c0_20], %39 {strides = array<i32>} : memref<1x8x128xf32, #tpu.memory_space<vmem>>, vector<1x8x128xf32>,
    } else {
    }
    %c0 = arith.constant 0 : index
    %3 = memref.load %arg2[%c0] : memref<1xf32, #tpu.memory_space<smem>>
    %c0_1 = arith.constant 0 : index
    %c0_2 = arith.constant 0 : index
    %4 = vector.load %arg3[%c0_1, %c0_2] : memref<16x128xf32, #tpu.memory_space<vmem>>, vector<16x128xf32>
    %c0_3 = arith.constant 0 : index
    %c0_4 = arith.constant 0 : index
    %5 = vector.load %arg4[%c0_3, %c0_4] : memref<16x128xf32, #tpu.memory_space<vmem>>, vector<16x128xf32>
    %6 = arith.addf %4, %5 : vector<16x128xf32>
    %c0_5 = arith.constant 0 : index
    %c0_6 = arith.constant 0 : index
    %7 = vector.load %arg5[%c0_5, %c0_6] : memref<16x128xf32, #tpu.memory_space<vmem>>, vector<16x128xf32>
    %8 = arith.addf %6, %7 : vector<16x128xf32>
    %c0_7 = arith.constant 0 : index
    %c0_8 = arith.constant 0 : index
    %9 = vector.load %arg6[%c0_7, %c0_8] : memref<16x128xf32, #tpu.memory_space<vmem>>, vector<16x128xf32>
    %10 = vector.broadcast %3 : f32 to vector<16x128xf32>
    %11 = arith.mulf %8, %10 : vector<16x128xf32>
    %12 = arith.subf %9, %11 : vector<16x128xf32>
    %13 = arith.mulf %12, %12 : vector<16x128xf32>
    %c1_i32 = arith.constant 1 : i32
    %14 = arith.muli %arg0, %c1_i32 : i32
    %15 = arith.addi %14, %arg1 : i32
    %c2048_i32 = arith.constant 2048 : i32
    %16 = arith.muli %15, %c2048_i32 : i32
    %17 = tpu.iota {dimensions = array<i32: 0>} : vector<16x128xi32>
    %18 = tpu.iota {dimensions = array<i32: 1>} : vector<16x128xi32>
    %c128_i32 = arith.constant 128 : i32
    %19 = vector.broadcast %c128_i32 : i32 to vector<16x128xi32>
    %20 = arith.muli %17, %19 : vector<16x128xi32>
    %21 = vector.broadcast %16 : i32 to vector<16x128xi32>
    %22 = arith.addi %21, %20 : vector<16x128xi32>
    %23 = arith.addi %22, %18 : vector<16x128xi32>
    %c2048_i32_9 = arith.constant 2048 : i32
    %24 = vector.broadcast %c2048_i32_9 : i32 to vector<16x128xi32>
    %25 = arith.cmpi slt, %23, %24 : vector<16x128xi32>
    %cst = arith.constant 0.000000e+00 : f32
    %26 = vector.broadcast %cst : f32 to vector<16x128xf32>
    %27 = arith.select %25, %13, %26 : vector<16x128xi1>, vector<16x128xf32>
    %28 = vector.shape_cast %27 : vector<16x128xf32> to vector<2x8x128xf32>
    %cst_10 = arith.constant dense<0.000000e+00> : vector<8x128xf32>
    %29 = vector.multi_reduction <add>, %28, %cst_10 [0] : vector<2x8x128xf32> to vector<8x128xf32>
    %c0_11 = arith.constant 0 : index
    %c0_12 = arith.constant 0 : index
    %c0_13 = arith.constant 0 : index
    %30 = vector.load %arg7[%c0_11, %c0_12, %c0_13] : memref<1x8x128xf32, #tpu.memory_space<vmem>>, vector<1x8x128xf32>
    %31 = vector.shape_cast %30 : vector<1x8x128xf32> to vector<8x128xf32>
    %32 = arith.addf %31, %29 : vector<8x128xf32>
    %c0_14 = arith.constant 0 : index
    %c0_15 = arith.constant 0 : index
    %c0_16 = arith.constant 0 : index
    %33 = vector.load %arg7[%c0_14, %c0_15, %c0_16] : memref<1x8x128xf32, #tpu.memory_space<vmem>>, vector<1x8x128xf32>
    %34 = vector.shape_cast %33 : vector<1x8x128xf32> to vector<8x128xf32>
    %35 = vector.shape_cast %32 : vector<8x128xf32> to vector<1x8x128xf32>
    tpu.vector_store %arg7[%c0_14, %c0_15, %c0_16], %35 {strides = array<i32>} : memref<1x8x128xf32, #tpu.memory_space<vmem>>, vector<1x8x128xf32>,
    return
  }
  func.func @transform_0(%arg0: i32, %arg1: i32) -> i32 {
    %c0_i32 = arith.constant 0 : i32
    %c0_i32_0 = arith.constant 0 : i32
    return %c0_i32 : i32
  }
  func.func @transform_1(%arg0: i32, %arg1: i32) -> (i32, i32) {
    %c1_i32 = arith.constant 1 : i32
    %0 = arith.muli %arg0, %c1_i32 : i32
    %1 = arith.addi %0, %arg1 : i32
    %c0_i32 = arith.constant 0 : i32
    %2 = arith.minsi %1, %c0_i32 : i32
    %c0_i32_0 = arith.constant 0 : i32
    %c0_i32_1 = arith.constant 0 : i32
    return %2, %c0_i32_0 : i32, i32
  }
  func.func @transform_2(%arg0: i32, %arg1: i32) -> (i32, i32) {
    %c1_i32 = arith.constant 1 : i32
    %0 = arith.muli %arg0, %c1_i32 : i32
    %1 = arith.addi %0, %arg1 : i32
    %c0_i32 = arith.constant 0 : i32
    %2 = arith.minsi %1, %c0_i32 : i32
    %c0_i32_0 = arith.constant 0 : i32
    %c0_i32_1 = arith.constant 0 : i32
    return %2, %c0_i32_0 : i32, i32
  }
  func.func @transform_3(%arg0: i32, %arg1: i32) -> (i32, i32) {
    %c1_i32 = arith.constant 1 : i32
    %0 = arith.muli %arg0, %c1_i32 : i32
    %1 = arith.addi %0, %arg1 : i32
    %c0_i32 = arith.constant 0 : i32
    %2 = arith.minsi %1, %c0_i32 : i32
    %c0_i32_0 = arith.constant 0 : i32
    %c0_i32_1 = arith.constant 0 : i32
    return %2, %c0_i32_0 : i32, i32
  }
  func.func @transform_4(%arg0: i32, %arg1: i32) -> (i32, i32) {
    %c1_i32 = arith.constant 1 : i32
    %0 = arith.muli %arg0, %c1_i32 : i32
    %1 = arith.addi %0, %arg1 : i32
    %c0_i32 = arith.constant 0 : i32
    %2 = arith.minsi %1, %c0_i32 : i32
    %c0_i32_0 = arith.constant 0 : i32
    %c0_i32_1 = arith.constant 0 : i32
    return %2, %c0_i32_0 : i32, i32
  }
  func.func @transform_5(%arg0: i32, %arg1: i32) -> (i32, i32, i32) {
    %c0_i32 = arith.constant 0 : i32
    %c0_i32_0 = arith.constant 0 : i32
    %c0_i32_1 = arith.constant 0 : i32
    return %arg0, %c0_i32, %c0_i32_0 : i32, i32, i32
  }
}

</mosaic_0001>

<llo_original>
// kernel: tpu_custom_call.1
$region0: #{tpu_custom_call.1}
  #allocation0 [shape = 'u32[]', space=smem, size = 0x4, offset = 0x4, fixed_abs, tag = 'smem constant byte address 0x4 - core index']
  #allocation1 [shape = 'u32[144,128]{1,0:T(1,128)}', space=vmem, size = 0x12000, scoped, tag = 'internal scratch']
  #allocation2 [shape = 'f32[1]{0:T(128)S(6)}', space=smem, size = 0x200, scoped, tag = 'scoped memory for tpu_custom_call.1']
  %s0 = inlined_call_operand.<no memory space> [shape: f32[1], index: 0, kind: input, shape index: {}]
  %s1 = inlined_call_operand.hbm [shape: f32[16,128], index: 1, kind: input, shape index: {}]
  %s2 = inlined_call_operand.hbm [shape: f32[16,128], index: 2, kind: input, shape index: {}]
  %s3 = inlined_call_operand.hbm [shape: f32[16,128], index: 3, kind: input, shape index: {}]
  %s4 = inlined_call_operand.hbm [shape: f32[16,128], index: 4, kind: input, shape index: {}]
  %s5 = inlined_call_operand.hbm [shape: f32[2,8,128], index: 5, kind: output, shape index: {}]
  %s6 = sld [smem:[#allocation0]]
  $region73: #{tpu_custom_call.1} parent=0
    _
  %s8 = ssub.s32 1, %s6
  %s9 = scalar_select 0, %s8, %s6
  %10 = sst [smem:[#allocation2]] %s0
  $region1: #{tpu_custom_call.1} parent=0
    #allocation3 [shape = 'u8[16384]{0}', space=vmem, size = 0x4000, scoped, tag = 'input window, operand 1']
    #allocation4 [shape = 's32[2]{0}', space=sflag, size = 0x8, scoped, tag = 'scoped memory for tpu_custom_call.1']
    #allocation5 [shape = 's32[2]{0}', space=sflag, size = 0x8, scoped, tag = 'scoped memory for tpu_custom_call.1']
    #allocation6 [shape = 'u8[16384]{0}', space=vmem, size = 0x4000, scoped, tag = 'input window, operand 2']
    #allocation7 [shape = 's32[2]{0}', space=sflag, size = 0x8, scoped, tag = 'scoped memory for tpu_custom_call.1']
    #allocation8 [shape = 'u8[16384]{0}', space=vmem, size = 0x4000, scoped, tag = 'input window, operand 3']
    #allocation9 [shape = 'u8[16384]{0}', space=vmem, size = 0x4000, scoped, tag = 'input window, operand 4']
    #allocation10 [shape = 's32[2]{0}', space=sflag, size = 0x8, scoped, tag = 'scoped memory for tpu_custom_call.1']
    #allocation11 [shape = 'u8[8192]{0}', space=vmem, size = 0x2000, scoped, tag = 'output window, operand 0']
    %11 = vsyncpa [#allocation4], 0
    %s12 = scalar_lea.sflag [#allocation4], 1
    %13 = vsyncpa %s12, 0
    %14 = vsyncpa [#allocation7], 0
    %s15 = scalar_lea.sflag [#allocation7], 1
    %16 = vsyncpa %s15, 0
    %17 = vsyncpa [#allocation10], 0
    %s18 = scalar_lea.sflag [#allocation10], 1
    %19 = vsyncpa %s18, 0
    %20 = vsyncpa [#allocation5], 0
    %s21 = scalar_lea.sflag [#allocation5], 1
    %22 = vsyncpa %s21, 0
    loop: start=0, step=1, limit=4
    $region2: #{tpu_custom_call.1} parent=1 // loop_pre_header
      _
    $region3: #{tpu_custom_call.1} parent=1 // loop_header
      %s24 = sphi 0, %s28
      %p25 = scmp.ge.s32.totalorder %s24, 4
      %s31 = sphi 0, %s43
      %s32 = sphi 0, %s39
      %s33 = sphi 0, %s31
      %s34 = sphi 0, %s32
      %s35 = sphi 0, %s33
      %s36 = sphi 0, %s34
      %s44 = sphi 0, %s44
      %s46 = sphi 0, %s44
      %s47 = sphi 0, %s46
      %s61 = sphi 0, %s47
      %s73 = sphi 0, %s75
      %s76 = sphi 0, %s73
      %s77 = sphi 0, %s76
      %s93 = sphi 0, %s77
      %s105 = sphi 0, %s107
      %s108 = sphi 0, %s105
      %s109 = sphi 0, %s108
      %s125 = sphi 0, %s109
      %s137 = sphi 0, %s139
      %s140 = sphi 0, %s137
      %s141 = sphi 0, %s140
      %s157 = sphi 0, %s141
      %s169 = sphi 0, %s171
      %s172 = sphi 0, %s169
      %s173 = sphi 0, %s172
      %s189 = sphi 0, %s173
      %s195 = sphi 0, %s197
      %s198 = sphi 0, %s195
      %s199 = sphi 0, %s198
      %s215 = sphi 0, %s199
    $region4: #{tpu_custom_call.1} parent=1 // loop_header_branch
      %27 = sbr.rel (%p25) target = $region8
    $region5: #{tpu_custom_call.1} parent=1 // loop_body
      %s29 = ssub.s32 %s24, 1
      %s30 = ssub.s32 %s24, 2
      %s37 = sadd.s32 1, %s32
      %p38 = scmp.ge.s32.totalorder %s37, 1
      %s39 = scalar_select %p38, 0, %s37
      %s40 = sadd.s32 1, %s31
      %s41 = scalar_select %p38, %s40, %s31
      %p42 = scmp.ge.s32.totalorder %s41, 2
      %s43 = scalar_select %p42, 0, %s41
      %s45 = sadd.s32 %s44, 1
      %p48 = scmp.eq.s32.totalorder %s24, 1
      %p49 = scmp.ne.s32.totalorder %s44, %s46
      %p50 = scmp.eq.s32.totalorder %s24, 0
      %p51 = por %p49, %p50
      %p52 = scmp.ne.s32.totalorder %s44, %s46
      %p53 = scmp.eq.s32.totalorder %s29, 1
      %p54 = por %p52, %p53
      %p55 = scmp.ne.s32.totalorder %s46, %s47
      %p56 = scmp.eq.s32.totalorder %s29, 0
      %p57 = por %p55, %p56
      %p58 = scmp.ne.s32.totalorder %s46, %s47
      %p59 = scmp.eq.s32.totalorder %s30, 1
      %p60 = por %p58, %p59
      %p62 = scmp.ne.s32.totalorder %s47, %s61
      %p63 = scmp.eq.s32.totalorder %s30, 0
      %p64 = por %p62, %p63
      %s65 = sadd.s32 %s31, %s32
      %p66 = scmp.lt.s32.totalorder %s65, 0
      %s67 = scalar_select %p66, %s65, 0
      %s68 = sadd.s32 %s43, %s39
      %p69 = scmp.lt.s32.totalorder %s68, 0
      %s70 = scalar_select %p69, %s68, 0
      %s71 = ssub.s32 %s67, %s70
      %p72 = scmp.eq.s32.totalorder %s71, 0
      %s74 = sadd.s32 %s73, 1
      %s75 = scalar_select %p72, %s73, %s74
      %p78 = pneg %p72
      %p79 = scmp.eq.s32.totalorder %s24, 1
      %p80 = por %p78, %p79
      %p81 = scmp.ne.s32.totalorder %s73, %s76
      %p82 = scmp.eq.s32.totalorder %s24, 0
      %p83 = por %p81, %p82
      %p84 = scmp.ne.s32.totalorder %s73, %s76
      %p85 = scmp.eq.s32.totalorder %s29, 1
      %p86 = por %p84, %p85
      %p87 = scmp.ne.s32.totalorder %s76, %s77
      %p88 = scmp.eq.s32.totalorder %s29, 0
      %p89 = por %p87, %p88
      %p90 = scmp.ne.s32.totalorder %s76, %s77
      %p91 = scmp.eq.s32.totalorder %s30, 1
      %p92 = por %p90, %p91
      %p94 = scmp.ne.s32.totalorder %s77, %s93
      %p95 = scmp.eq.s32.totalorder %s30, 0
      %p96 = por %p94, %p95
      %s97 = sadd.s32 %s31, %s32
      %p98 = scmp.lt.s32.totalorder %s97, 0
      %s99 = scalar_select %p98, %s97, 0
      %s100 = sadd.s32 %s43, %s39
      %p101 = scmp.lt.s32.totalorder %s100, 0
      %s102 = scalar_select %p101, %s100, 0
      %s103 = ssub.s32 %s99, %s102
      %p104 = scmp.eq.s32.totalorder %s103, 0
      %s106 = sadd.s32 %s105, 1
      %s107 = scalar_select %p104, %s105, %s106
      %p110 = pneg %p104
      %p111 = scmp.eq.s32.totalorder %s24, 1
      %p112 = por %p110, %p111
      %p113 = scmp.ne.s32.totalorder %s105, %s108
      %p114 = scmp.eq.s32.totalorder %s24, 0
      %p115 = por %p113, %p114
      %p116 = scmp.ne.s32.totalorder %s105, %s108
      %p117 = scmp.eq.s32.totalorder %s29, 1
      %p118 = por %p116, %p117
      %p119 = scmp.ne.s32.totalorder %s108, %s109
      %p120 = scmp.eq.s32.totalorder %s29, 0
      %p121 = por %p119, %p120
      %p122 = scmp.ne.s32.totalorder %s108, %s109
      %p123 = scmp.eq.s32.totalorder %s30, 1
      %p124 = por %p122, %p123
      %p126 = scmp.ne.s32.totalorder %s109, %s125
      %p127 = scmp.eq.s32.totalorder %s30, 0
      %p128 = por %p126, %p127
      %s129 = sadd.s32 %s31, %s32
      %p130 = scmp.lt.s32.totalorder %s129, 0
      %s131 = scalar_select %p130, %s129, 0
      %s132 = sadd.s32 %s43, %s39
      %p133 = scmp.lt.s32.totalorder %s132, 0
      %s134 = scalar_select %p133, %s132, 0
      %s135 = ssub.s32 %s131, %s134
      %p136 = scmp.eq.s32.totalorder %s135, 0
      %s138 = sadd.s32 %s137, 1
      %s139 = scalar_select %p136, %s137, %s138
      %p142 = pneg %p136
      %p143 = scmp.eq.s32.totalorder %s24, 1
      %p144 = por %p142, %p143
      %p145 = scmp.ne.s32.totalorder %s137, %s140
      %p146 = scmp.eq.s32.totalorder %s24, 0
      %p147 = por %p145, %p146
      %p148 = scmp.ne.s32.totalorder %s137, %s140
      %p149 = scmp.eq.s32.totalorder %s29, 1
      %p150 = por %p148, %p149
      %p151 = scmp.ne.s32.totalorder %s140, %s141
      %p152 = scmp.eq.s32.totalorder %s29, 0
      %p153 = por %p151, %p152
      %p154 = scmp.ne.s32.totalorder %s140, %s141
      %p155 = scmp.eq.s32.totalorder %s30, 1
      %p156 = por %p154, %p155
      %p158 = scmp.ne.s32.totalorder %s141, %s157
      %p159 = scmp.eq.s32.totalorder %s30, 0
      %p160 = por %p158, %p159
      %s161 = sadd.s32 %s31, %s32
      %p162 = scmp.lt.s32.totalorder %s161, 0
      %s163 = scalar_select %p162, %s161, 0
      %s164 = sadd.s32 %s43, %s39
      %p165 = scmp.lt.s32.totalorder %s164, 0
      %s166 = scalar_select %p165, %s164, 0
      %s167 = ssub.s32 %s163, %s166
      %p168 = scmp.eq.s32.totalorder %s167, 0
      %s170 = sadd.s32 %s169, 1
      %s171 = scalar_select %p168, %s169, %s170
      %p174 = pneg %p168
      %p175 = scmp.eq.s32.totalorder %s24, 1
      %p176 = por %p174, %p175
      %p177 = scmp.ne.s32.totalorder %s169, %s172
      %p178 = scmp.eq.s32.totalorder %s24, 0
      %p179 = por %p177, %p178
      %p180 = scmp.ne.s32.totalorder %s169, %s172
      %p181 = scmp.eq.s32.totalorder %s29, 1
      %p182 = por %p180, %p181
      %p183 = scmp.ne.s32.totalorder %s172, %s173
      %p184 = scmp.eq.s32.totalorder %s29, 0
      %p185 = por %p183, %p184
      %p186 = scmp.ne.s32.totalorder %s172, %s173
      %p187 = scmp.eq.s32.totalorder %s30, 1
      %p188 = por %p186, %p187
      %p190 = scmp.ne.s32.totalorder %s173, %s189
      %p191 = scmp.eq.s32.totalorder %s30, 0
      %p192 = por %p190, %p191
      %s193 = ssub.s32 %s31, %s43
      %p194 = scmp.eq.s32.totalorder %s193, 0
      %s196 = sadd.s32 %s195, 1
      %s197 = scalar_select %p194, %s195, %s196
      %p200 = pneg %p194
      %p201 = scmp.eq.s32.totalorder %s24, 1
      %p202 = por %p200, %p201
      %p203 = scmp.ne.s32.totalorder %s195, %s198
      %p204 = scmp.eq.s32.totalorder %s24, 0
      %p205 = por %p203, %p204
      %p206 = scmp.ne.s32.totalorder %s195, %s198
      %p207 = scmp.eq.s32.totalorder %s29, 1
      %p208 = por %p206, %p207
      %p209 = scmp.ne.s32.totalorder %s198, %s199
      %p210 = scmp.eq.s32.totalorder %s29, 0
      %p211 = por %p209, %p210
      %p212 = scmp.ne.s32.totalorder %s198, %s199
      %p213 = scmp.eq.s32.totalorder %s30, 1
      %p214 = por %p212, %p213
      %p216 = scmp.ne.s32.totalorder %s199, %s215
      %p217 = scmp.eq.s32.totalorder %s30, 0
      %p218 = por %p216, %p217
      %p219 = scmp.le.s32.totalorder 1, %s24
      %p220 = scmp.lt.s32.totalorder %s24, 3
      %p221 = pnand %p219, %p220
      %p222 = pneg %p221
      // Predicated region
      $region9: #{tpu_custom_call.1} parent=5 // pred_check
        _
      $region10: #{tpu_custom_call.1} parent=5 // pred_check_branch
        %224 = sbr.rel (%p221) target = $region12
      $region11: #{tpu_custom_call.1} parent=5 // pred_region
        %s225 = ssub.s32 %s24, 1
        // Predicated region
        $region13: #{tpu_custom_call.1} parent=11 // pred_check
          %p226 = pneg %p57
        $region14: #{tpu_custom_call.1} parent=11 // pred_check_branch
          %228 = sbr.rel (%p226) target = $region16
        $region15: #{tpu_custom_call.1} parent=11 // pred_region
          _
        $region16: #{tpu_custom_call.1} parent=11 // pred_fallthru
          _
      $region12: #{tpu_custom_call.1} parent=5 // pred_fallthru
        _
      %p229 = scmp.lt.s32.totalorder %s24, 2
      // Predicated region
      $region17: #{tpu_custom_call.1} parent=5 // pred_check
        %p230 = pneg %p229
      $region18: #{tpu_custom_call.1} parent=5 // pred_check_branch
        %232 = sbr.rel (%p230) target = $region20
      $region19: #{tpu_custom_call.1} parent=5 // pred_region
        // Predicated region
        $region21: #{tpu_custom_call.1} parent=19 // pred_check
          %p233 = pneg %p83
        $region22: #{tpu_custom_call.1} parent=19 // pred_check_branch
          %235 = sbr.rel (%p233) target = $region24
        $region23: #{tpu_custom_call.1} parent=19 // pred_region
          %s236 = sand.u32 %s73, 1
          %s237 = scalar_lea.sflag [#allocation4], %s236
          %s238 = sand.u32 %s73, 1
          %s239 = smul.addr %s238, 16
          %s240 = scalar_lea.vmem [#allocation3], %s239
          %s241 = sadd.s32 %s31, %s32
          %p242 = scmp.lt.s32.totalorder %s241, 0
          %s243 = scalar_select %p242, %s241, 0
          %s244 = smul.u32 2, %s243
          %s246 = ssub.s32 256, 256
          %247 = vsyncadd %s237, %s246
          %s248 = smul.addr %s244, 128
          %s249 = scalar_lea.hbm %s1, %s248
          %s250 = sshll.u32 %s240, 4
          %s251 = int_to_ptr.vmem [resolvable:$true] %s250
          %256 = dma.hbm_to_vmem [thread:$0]  %s249, 256, %s251, %s237, 128, 128, 8
        $region24: #{tpu_custom_call.1} parent=19 // pred_fallthru
          _
        // Predicated region
        $region25: #{tpu_custom_call.1} parent=19 // pred_check
          %p257 = pneg %p115
        $region26: #{tpu_custom_call.1} parent=19 // pred_check_branch
          %259 = sbr.rel (%p257) target = $region28
        $region27: #{tpu_custom_call.1} parent=19 // pred_region
          %s260 = sand.u32 %s24, 1
          %s261 = scalar_lea.sflag [#allocation7], %s260
          %s262 = sand.u32 %s105, 1
          %s263 = smul.addr %s262, 16
          %s264 = scalar_lea.vmem [#allocation6], %s263
          %s265 = sadd.s32 %s31, %s32
          %p266 = scmp.lt.s32.totalorder %s265, 0
          %s267 = scalar_select %p266, %s265, 0
          %s268 = smul.u32 2, %s267
          %s270 = ssub.s32 256, 256
          %271 = vsyncadd %s261, %s270
          %s272 = smul.addr %s268, 128
          %s273 = scalar_lea.hbm %s2, %s272
          %s274 = sshll.u32 %s264, 4
          %s275 = int_to_ptr.vmem [resolvable:$true] %s274
          %280 = dma.hbm_to_vmem [thread:$0]  %s273, 256, %s275, %s261, 128, 128, 8
        $region28: #{tpu_custom_call.1} parent=19 // pred_fallthru
          _
        // Predicated region
        $region29: #{tpu_custom_call.1} parent=19 // pred_check
          %p281 = pneg %p147
        $region30: #{tpu_custom_call.1} parent=19 // pred_check_branch
          %283 = sbr.rel (%p281) target = $region32
        $region31: #{tpu_custom_call.1} parent=19 // pred_region
          %s284 = sand.u32 %s24, 1
          %s285 = scalar_lea.sflag [#allocation7], %s284
          %s286 = sand.u32 %s137, 1
          %s287 = smul.addr %s286, 16
          %s288 = scalar_lea.vmem [#allocation8], %s287
          %s289 = sadd.s32 %s31, %s32
          %p290 = scmp.lt.s32.totalorder %s289, 0
          %s291 = scalar_select %p290, %s289, 0
          %s292 = smul.u32 2, %s291
          %s294 = ssub.s32 256, 256
          %295 = vsyncadd %s285, %s294
          %s296 = smul.addr %s292, 128
          %s297 = scalar_lea.hbm %s3, %s296
          %s298 = sshll.u32 %s288, 4
          %s299 = int_to_ptr.vmem [resolvable:$true] %s298
          %304 = dma.hbm_to_vmem [thread:$0]  %s297, 256, %s299, %s285, 128, 128, 8
        $region32: #{tpu_custom_call.1} parent=19 // pred_fallthru
          _
        // Predicated region
        $region33: #{tpu_custom_call.1} parent=19 // pred_check
          %p305 = pneg %p179
        $region34: #{tpu_custom_call.1} parent=19 // pred_check_branch
          %307 = sbr.rel (%p305) target = $region36
        $region35: #{tpu_custom_call.1} parent=19 // pred_region
          %s308 = sand.u32 %s169, 1
          %s309 = scalar_lea.sflag [#allocation10], %s308
          %s310 = sand.u32 %s169, 1
          %s311 = smul.addr %s310, 16
          %s312 = scalar_lea.vmem [#allocation9], %s311
          %s313 = sadd.s32 %s31, %s32
          %p314 = scmp.lt.s32.totalorder %s313, 0
          %s315 = scalar_select %p314, %s313, 0
          %s316 = smul.u32 2, %s315
          %s318 = ssub.s32 256, 256
          %319 = vsyncadd %s309, %s318
          %s320 = smul.addr %s316, 128
          %s321 = scalar_lea.hbm %s4, %s320
          %s322 = sshll.u32 %s312, 4
          %s323 = int_to_ptr.vmem [resolvable:$true] %s322
          %328 = dma.hbm_to_vmem [thread:$0]  %s321, 256, %s323, %s309, 128, 128, 8
        $region36: #{tpu_custom_call.1} parent=19 // pred_fallthru
          _
      $region20: #{tpu_custom_call.1} parent=5 // pred_fallthru
        _
      %p329 = scmp.le.s32.totalorder 1, %s24
      %p330 = scmp.lt.s32.totalorder %s24, 3
      %p331 = pnand %p329, %p330
      %p332 = pneg %p331
      // Predicated region
      $region37: #{tpu_custom_call.1} parent=5 // pred_check
        _
      $region38: #{tpu_custom_call.1} parent=5 // pred_check_branch
        %334 = sbr.rel (%p331) target = $region40
      $region39: #{tpu_custom_call.1} parent=5 // pred_region
        %s335 = ssub.s32 %s24, 1
        %s336 = sand.u32 %s76, 1
        %s337 = scalar_lea.sflag [#allocation4], %s336
        %s338 = sand.u32 %s76, 1
        %s339 = smul.addr %s338, 16
        %s340 = scalar_lea.vmem [#allocation3], %s339
        // Predicated region
        $region41: #{tpu_custom_call.1} parent=39 // pred_check
          %p341 = pneg %p89
        $region42: #{tpu_custom_call.1} parent=39 // pred_check_branch
          %343 = sbr.rel (%p341) target = $region44
        $region43: #{tpu_custom_call.1} parent=39 // pred_region
          %344 = dma.done %s337, 256
        $region44: #{tpu_custom_call.1} parent=39 // pred_fallthru
          _
        %s345 = sand.u32 %s29, 1
        %s346 = scalar_lea.sflag [#allocation7], %s345
        %s347 = sand.u32 %s108, 1
        %s348 = smul.addr %s347, 16
        %s349 = scalar_lea.vmem [#allocation6], %s348
        // Predicated region
        $region45: #{tpu_custom_call.1} parent=39 // pred_check
          %p350 = pneg %p121
        $region46: #{tpu_custom_call.1} parent=39 // pred_check_branch
          %352 = sbr.rel (%p350) target = $region48
        $region47: #{tpu_custom_call.1} parent=39 // pred_region
          %353 = dma.done %s346, 256
        $region48: #{tpu_custom_call.1} parent=39 // pred_fallthru
          _
        %s354 = sand.u32 %s29, 1
        %s355 = scalar_lea.sflag [#allocation7], %s354
        %s356 = sand.u32 %s140, 1
        %s357 = smul.addr %s356, 16
        %s358 = scalar_lea.vmem [#allocation8], %s357
        // Predicated region
        $region49: #{tpu_custom_call.1} parent=39 // pred_check
          %p359 = pneg %p153
        $region50: #{tpu_custom_call.1} parent=39 // pred_check_branch
          %361 = sbr.rel (%p359) target = $region52
        $region51: #{tpu_custom_call.1} parent=39 // pred_region
          %362 = dma.done %s355, 256
        $region52: #{tpu_custom_call.1} parent=39 // pred_fallthru
          _
        %s363 = sand.u32 %s172, 1
        %s364 = scalar_lea.sflag [#allocation10], %s363
        %s365 = sand.u32 %s172, 1
        %s366 = smul.addr %s365, 16
        %s367 = scalar_lea.vmem [#allocation9], %s366
        // Predicated region
        $region53: #{tpu_custom_call.1} parent=39 // pred_check
          %p368 = pneg %p185
        $region54: #{tpu_custom_call.1} parent=39 // pred_check_branch
          %370 = sbr.rel (%p368) target = $region56
        $region55: #{tpu_custom_call.1} parent=39 // pred_region
          %371 = dma.done %s364, 256
        $region56: #{tpu_custom_call.1} parent=39 // pred_fallthru
          _
        %p372 = pneg %p57
        %p373 = pneg %p54
        %s374 = sand.u32 %s76, 1
        %s375 = scalar_lea.sflag [#allocation4], %s374
        %s376 = sand.u32 %s76, 1
        %s377 = smul.addr %s376, 16
        %s378 = scalar_lea.vmem [#allocation3], %s377
        %p379 = pneg %p89
        %p380 = pneg %p86
        %s381 = sand.u32 %s29, 1
        %s382 = scalar_lea.sflag [#allocation7], %s381
        %s383 = sand.u32 %s108, 1
        %s384 = smul.addr %s383, 16
        %s385 = scalar_lea.vmem [#allocation6], %s384
        %p386 = pneg %p121
        %p387 = pneg %p118
        %s388 = sand.u32 %s29, 1
        %s389 = scalar_lea.sflag [#allocation7], %s388
        %s390 = sand.u32 %s140, 1
        %s391 = smul.addr %s390, 16
        %s392 = scalar_lea.vmem [#allocation8], %s391
        %p393 = pneg %p153
        %p394 = pneg %p150
        %s395 = sand.u32 %s172, 1
        %s396 = scalar_lea.sflag [#allocation10], %s395
        %s397 = sand.u32 %s172, 1
        %s398 = smul.addr %s397, 16
        %s399 = scalar_lea.vmem [#allocation9], %s398
        %p400 = pneg %p185
        %p401 = pneg %p182
        %p402 = pneg %p211
        %p403 = pneg %p208
        %s404 = sand.u32 %s198, 1
        %s405 = scalar_lea.sflag [#allocation5], %s404
        %s406 = sand.u32 %s198, 1
        %s407 = smul.addr %s406, 8
        %s408 = scalar_lea.vmem [#allocation11], %s407
        %s409 = sadd.s32 %s33, %s34
        %p410 = scmp.lt.s32.totalorder %s409, 0
        %s411 = scalar_select %p410, %s409, 0
        %s412 = smul.u32 2, %s411
        %s413 = sadd.s32 %s33, %s34
        %p414 = scmp.lt.s32.totalorder %s413, 0
        %s415 = scalar_select %p414, %s413, 0
        %s416 = smul.u32 2, %s415
        %s417 = sadd.s32 %s33, %s34
        %p418 = scmp.lt.s32.totalorder %s417, 0
        %s419 = scalar_select %p418, %s417, 0
        %s420 = smul.u32 2, %s419
        %s421 = sadd.s32 %s33, %s34
        %p422 = scmp.lt.s32.totalorder %s421, 0
        %s423 = scalar_select %p422, %s421, 0
        %s424 = smul.u32 2, %s423
        %p425 = scmp.eq.s32.totalorder %s34, 0
        // Predicated region
        $region57: #{tpu_custom_call.1} parent=39 // pred_check
          %p426 = pneg %p425
        $region58: #{tpu_custom_call.1} parent=39 // pred_check_branch
          %428 = sbr.rel (%p426) target = $region60
        $region59: #{tpu_custom_call.1} parent=39 // pred_region
          %429 = vst [vmem:[%s408] sm:$0xff] 0.0
        $region60: #{tpu_custom_call.1} parent=39 // pred_fallthru
          _
        %s430 = sld [smem:[#allocation2]]
        %v431 = vld [vmem:[%s340] sm:$0xff]
        %v432 = vld [vmem:[%s340 + $0x8] sm:$0xff]
        %v433 = vld [vmem:[%s349] sm:$0xff]
        %v434 = vld [vmem:[%s349 + $0x8] sm:$0xff]
        %v435 = vadd.f32 %v431, %v433
        %v436 = vadd.f32 %v432, %v434
        %v437 = vld [vmem:[%s358] sm:$0xff]
        %v438 = vld [vmem:[%s358 + $0x8] sm:$0xff]
        %v439 = vadd.f32 %v435, %v437
        %v440 = vadd.f32 %v436, %v438
        %v441 = vld [vmem:[%s367] sm:$0xff]
        %v442 = vld [vmem:[%s367 + $0x8] sm:$0xff]
        %v443 = vstv %s430
        %v444 = vmul.f32 %v439, %v443
        %v445 = vmul.f32 %v440, %v443
        %v446 = vsub.f32 %v441, %v444
        %v447 = vsub.f32 %v442, %v445
        %v448 = vmul.f32 %v446, %v446
        %v449 = vmul.f32 %v447, %v447
        %s450 = sadd.s32 %s33, %s34
        %s451 = smul.u32 %s450, 2048
        %v452 = vlaneseq
        %v453 = vshrl.u32 %v452, 7
        %v454 = vadd.s32 %v453, 8
        %v455 = vlaneseq
        %v456 = vand.u32 %v455, 127
        %v457 = vmul.u32 %v453, 128
        %v458 = vmul.u32 %v454, 128
        %v459 = vstv %s451
        %v460 = vadd.s32 %v459, %v457
        %v461 = vadd.s32 %v459, %v458
        %v462 = vadd.s32 %v460, %v456
        %v463 = vadd.s32 %v461, %v456
        %vm464 = vcmp.lt.s32.totalorder %v462, 2048
        %vm465 = vcmp.lt.s32.totalorder %v463, 2048
        %v466 = vsel %vm464, %v448, 0.0
        %v467 = vsel %vm465, %v449, 0.0
        %v468 = vadd.f32 %v466, %v467
        %v469 = vld [vmem:[%s408] sm:$0xff]
        %v470 = vadd.f32 %v469, %v468
        %471 = vst [vmem:[%s408] sm:$0xff] %v470
        %s472 = sand.u32 %s198, 1
        %s473 = scalar_lea.sflag [#allocation5], %s472
        %s474 = sand.u32 %s198, 1
        %s475 = smul.addr %s474, 8
        %s476 = scalar_lea.vmem [#allocation11], %s475
        // Predicated region
        $region61: #{tpu_custom_call.1} parent=39 // pred_check
          %p477 = pneg %p208
        $region62: #{tpu_custom_call.1} parent=39 // pred_check_branch
          %479 = sbr.rel (%p477) target = $region64
        $region63: #{tpu_custom_call.1} parent=39 // pred_region
          %s481 = ssub.s32 128, 128
          %482 = vsyncadd %s473, %s481
          %s483 = smul.addr %s33, 128
          %s484 = scalar_lea.hbm %s5, %s483
          %s486 = sshll.u32 %s476, 4
          %s487 = int_to_ptr.vmem [resolvable:$true] %s486
          %489 = dma.vmem_to_hbm [thread:$0]  %s487, 128, %s484, %s473
        $region64: #{tpu_custom_call.1} parent=39 // pred_fallthru
          _
      $region40: #{tpu_custom_call.1} parent=5 // pred_fallthru
        _
      %p490 = scmp.le.s32.totalorder 2, %s24
      // Predicated region
      $region65: #{tpu_custom_call.1} parent=5 // pred_check
        %p491 = pneg %p490
      $region66: #{tpu_custom_call.1} parent=5 // pred_check_branch
        %493 = sbr.rel (%p491) target = $region68
      $region67: #{tpu_custom_call.1} parent=5 // pred_region
        %s494 = ssub.s32 %s24, 2
        // Predicated region
        $region69: #{tpu_custom_call.1} parent=67 // pred_check
          %p495 = pneg %p214
        $region70: #{tpu_custom_call.1} parent=67 // pred_check_branch
          %497 = sbr.rel (%p495) target = $region72
        $region71: #{tpu_custom_call.1} parent=67 // pred_region
          %s498 = sand.u32 %s199, 1
          %s499 = scalar_lea.sflag [#allocation5], %s498
          %s500 = sand.u32 %s199, 1
          %s501 = smul.addr %s500, 8
          %s502 = scalar_lea.vmem [#allocation11], %s501
          %503 = dma.done %s499, 128
        $region72: #{tpu_custom_call.1} parent=67 // pred_fallthru
          _
      $region68: #{tpu_custom_call.1} parent=5 // pred_fallthru
        _
    $region6: #{tpu_custom_call.1} parent=1 // loop_footer
      %s28 = sadd.s32 1, %s24
    $region7: #{tpu_custom_call.1} parent=1 // loop_footer_branch
      %23 = sbr.rel target = $region3
    $region8: #{tpu_custom_call.1} parent=1 // loop_exit
      _
    %504 = vsyncpa [#allocation4], 1
    %s505 = scalar_lea.sflag [#allocation4], 1
    %506 = vsyncpa %s505, 1
    %507 = vsyncpa [#allocation7], 1
    %s508 = scalar_lea.sflag [#allocation7], 1
    %509 = vsyncpa %s508, 1
    %510 = vsyncpa [#allocation10], 1
    %s511 = scalar_lea.sflag [#allocation10], 1
    %512 = vsyncpa %s511, 1
    %513 = vsyncpa [#allocation5], 1
    %s514 = scalar_lea.sflag [#allocation5], 1
    %515 = vsyncpa %s514, 1

</llo_original>
